<compile_context>
chip_gen: v7x
topology: tpu7x:2x2x1
jax: 0.10.0
libtpu: 0.0.40
codegen_flags: <defaults>
</compile_context>

<pallas_src>
import functools

import jax
import jax.numpy as jnp
from jax.experimental import pallas as pl
from jax.experimental.pallas import tpu as pltpu


def _round_up(x, m):
    return (x + m - 1) // m * m


def _cdiv(a, b):
    return (a + b - 1) // b


def _pad2d(x, rows, cols):
    pr, pc = rows - x.shape[0], cols - x.shape[1]
    if pr or pc:
        x = jnp.pad(x, ((0, pr), (0, pc)))
    return x


# -----------------------------------------------------------------------------
# Fused kernel (D_in <= D_out):  out = (adj @ inp) @ W + bias
# grid = (row blocks, nonzero-k slots); acc is a resident (tm, D_in_pad) tile.
# nk_ref/cnt_ref are scalar-prefetched SMEM tables of nonzero adjacency tiles.
# -----------------------------------------------------------------------------
def _fused_awi_kernel(nk_ref, cnt_ref, adj_ref, x_ref, w_ref, b_ref,
                      out_ref, acc_ref):
    i = pl.program_id(0)
    j = pl.program_id(1)

    @pl.when(j == 0)
    def _():
        acc_ref[...] = jnp.zeros_like(acc_ref)

    # Only accumulate real (nonzero) adjacency tiles; padded slots revisit the
    # previous block (no DMA) and are skipped here.
    @pl.when(j < cnt_ref[i])
    def _():
        acc_ref[...] += jnp.dot(adj_ref[...].astype(jnp.float32), x_ref[...],
                                preferred_element_type=jnp.float32)

    @pl.when(j == pl.num_programs(1) - 1)
    def _():
        out_ref[...] = (
            jnp.dot(acc_ref[...], w_ref[...], preferred_element_type=jnp.float32)
            + b_ref[...]
        ).astype(out_ref.dtype)


# -----------------------------------------------------------------------------
# Path B (D_in > D_out):  support = inp @ W, then out = adj @ support + bias
# -----------------------------------------------------------------------------
def _support_kernel(x_ref, w_ref, s_ref):
    s_ref[...] = jnp.dot(x_ref[...], w_ref[...],
                         preferred_element_type=jnp.float32).astype(s_ref.dtype)


def _adj_support_kernel(nk_ref, cnt_ref, adj_ref, s_ref, b_ref,
                        out_ref, acc_ref):
    i = pl.program_id(0)
    j = pl.program_id(1)

    @pl.when(j == 0)
    def _():
        acc_ref[...] = jnp.zeros_like(acc_ref)

    @pl.when(j < cnt_ref[i])
    def _():
        acc_ref[...] += jnp.dot(adj_ref[...].astype(jnp.float32), s_ref[...],
                                preferred_element_type=jnp.float32)

    @pl.when(j == pl.num_programs(1) - 1)
    def _():
        out_ref[...] = (acc_ref[...] + b_ref[...]).astype(out_ref.dtype)


@functools.partial(jax.jit, static_argnames=("tm", "tk", "adj_dtype"))
def graph_conv(inp, adj_mat, kernel, bias, *, tm=512, tk=1024,
               adj_dtype=jnp.bfloat16):
    """GraphConv forward: adj_mat @ (inp @ kernel) + bias, tiled for TPU."""
    n, d_in = inp.shape
    d_out = kernel.shape[1]
    assert adj_mat.shape == (n, n)
    assert kernel.shape == (d_in, d_out)
    assert bias.shape == (d_out,)

    # Lane-dense feature dims (multiples of 128 -> unmasked vst, full MXU cols).
    d_in_pad = _round_up(d_in, 128)
    d_out_pad = _round_up(d_out, 128)

    # Balanced row/reduction tiles: bound padding waste to < one tile instead of
    # rounding N up to the nominal tile size.
    tm = _round_up(_cdiv(n, _cdiv(n, tm)), 8)      # sublane-aligned row tile
    tk = _round_up(_cdiv(n, _cdiv(n, tk)), 128)    # lane-aligned reduction tile
    # v7x has 2 TensorCores; "parallel" only shards grid axes, so make sure the
    # row axis has at least 2 blocks when N allows it (harmless on v5e/v6e).
    if n > 8 and _round_up(n, tm) // tm < 2:
        tm = _round_up(_cdiv(n, 2), 8)
    n_rows = _round_up(n, tm)                      # padded rows of adj / output
    n_cols = _round_up(n, tk)                      # padded cols of adj == rows of inp
    n_i, n_k = n_rows // tm, n_cols // tk

    adj_p32 = _pad2d(adj_mat, n_rows, n_cols)
    inp_p = _pad2d(inp, n_cols, d_in_pad)
    w_p = _pad2d(kernel, d_in_pad, d_out_pad)
    b_p = _pad2d(bias.reshape(1, d_out), 1, d_out_pad)

    # --- Sparsity tables (torch.spmm): per row block, the compacted list of
    # nonzero adjacency k-tiles + its length.  Padded slots repeat the last
    # valid index so the pipeline revisits (no DMA) and pl.when skips compute.
    nz = (adj_p32.reshape(n_i, tm, n_k, tk) != 0).any(axis=(1, 3))       # (n_i, n_k)
    cnt = nz.sum(axis=1, dtype=jnp.int32)                                # (n_i,)
    order = jnp.argsort(jnp.logical_not(nz).astype(jnp.int32),
                        axis=1).astype(jnp.int32)                        # stable: nz first
    last = jnp.maximum(cnt - 1, 0)[:, None]
    nk_tbl = jnp.where(jnp.arange(n_k, dtype=jnp.int32)[None, :] < cnt[:, None],
                       order, jnp.take_along_axis(order, last, axis=1))

    # 0/1 adjacencies are exact in bf16; this halves the dominant HBM stream.
    adj_p = adj_p32.astype(adj_dtype)
    adj_item = jnp.dtype(adj_dtype).itemsize

    grid = (n_i, n_k)
    sem = ("parallel", "arbitrary")    # rows shard across TCs; k is a reduction

    # Explicit VMEM budget (v5e scoped default is only 16 MiB; v7x phys 64 MiB).
    d_x_pad = d_in_pad if d_in <= d_out else d_out_pad   # k-operand / acc width
    est_adj = (2 * tm * tk * adj_item            # adj, double-buffered
               + 2 * tk * d_x_pad * 4            # inp / support, double-buffered
               + 2 * tm * d_out_pad * 4          # out, double-buffered
               + tm * d_x_pad * 4                # accumulator
               + d_in_pad * d_out_pad * 4        # W (single-buffered)
               + d_out_pad * 4)                  # bias
    est_sup = (2 * tk * d_in_pad * 4 + d_in_pad * d_out_pad * 4
               + 2 * tk * d_out_pad * 4)
    est = max(est_adj, est_sup)
    vmem_limit = int(min(max(est * 5 // 4 + (2 << 20), 16 << 20), 48 << 20))
    cparams = pltpu.CompilerParams(dimension_semantics=sem,
                                   vmem_limit_bytes=vmem_limit)

    if d_in <= d_out:
        # out = (adj @ inp) @ W + b  — cheaper contraction first (N^2 * D_in).
        cost = pl.CostEstimate(
            flops=2 * n_rows * n_cols * d_in_pad
                  + 2 * n_rows * d_in_pad * d_out_pad,
            transcendentals=0,
            bytes_accessed=int(adj_p.size * adj_item
                               + n_i * inp_p.size * 4      # re-read per row block
                               + w_p.size * 4 + b_p.size * 4
                               + n_rows * d_out_pad * 4),
        )
        out_p = pl.pallas_call(
            _fused_awi_kernel,
            out_shape=jax.ShapeDtypeStruct((n_rows, d_out_pad), inp.dtype),
            grid_spec=pltpu.PrefetchScalarGridSpec(
                num_scalar_prefetch=2,
                grid=grid,
                in_specs=[
                    pl.BlockSpec((tm, tk),
                                 lambda i, j, nk, c: (i, nk[i, j])),          # adj
                    pl.BlockSpec((tk, d_in_pad),
                                 lambda i, j, nk, c: (nk[i, j], 0)),          # inp
                    pl.BlockSpec((d_in_pad, d_out_pad),
                                 lambda i, j, nk, c: (0, 0),
                                 pipeline_mode=pl.Buffered(1)),               # W
                    pl.BlockSpec((1, d_out_pad),
                                 lambda i, j, nk, c: (0, 0),
                                 pipeline_mode=pl.Buffered(1)),               # bias
                ],
                out_specs=pl.BlockSpec((tm, d_out_pad),
                                       lambda i, j, nk, c: (i, 0)),
                scratch_shapes=[pltpu.VMEM((tm, d_in_pad), jnp.float32)],
            ),
            compiler_params=cparams,
            cost_estimate=cost,
        )(nk_tbl, cnt, adj_p, inp_p, w_p, b_p)
    else:
        # support = inp @ W  (computed once, tiled over rows of inp, f32).
        support = pl.pallas_call(
            _support_kernel,
            out_shape=jax.ShapeDtypeStruct((n_cols, d_out_pad), jnp.float32),
            grid_spec=pltpu.PrefetchScalarGridSpec(
                num_scalar_prefetch=0,
                grid=(n_cols // tk,),
                in_specs=[
                    pl.BlockSpec((tk, d_in_pad), lambda i: (i, 0)),
                    pl.BlockSpec((d_in_pad, d_out_pad), lambda i: (0, 0),
                                 pipeline_mode=pl.Buffered(1)),
                ],
                out_specs=pl.BlockSpec((tk, d_out_pad), lambda i: (i, 0)),
            ),
            compiler_params=pltpu.CompilerParams(
                dimension_semantics=("parallel",),
                vmem_limit_bytes=vmem_limit),
            cost_estimate=pl.CostEstimate(
                flops=2 * n_cols * d_in_pad * d_out_pad,
                transcendentals=0,
                bytes_accessed=int(4 * (inp_p.size + w_p.size
                                        + n_cols * d_out_pad))),
        )(inp_p, w_p)

        # out = adj @ support + b, sparse-tile-skipped reduction over adj cols.
        out_p = pl.pallas_call(
            _adj_support_kernel,
            out_shape=jax.ShapeDtypeStruct((n_rows, d_out_pad), inp.dtype),
            grid_spec=pltpu.PrefetchScalarGridSpec(
                num_scalar_prefetch=2,
                grid=grid,
                in_specs=[
                    pl.BlockSpec((tm, tk),
                                 lambda i, j, nk, c: (i, nk[i, j])),          # adj
                    pl.BlockSpec((tk, d_out_pad),
                                 lambda i, j, nk, c: (nk[i, j], 0)),          # support
                    pl.BlockSpec((1, d_out_pad),
                                 lambda i, j, nk, c: (0, 0),
                                 pipeline_mode=pl.Buffered(1)),               # bias
                ],
                out_specs=pl.BlockSpec((tm, d_out_pad),
                                       lambda i, j, nk, c: (i, 0)),
                scratch_shapes=[pltpu.VMEM((tm, d_out_pad), jnp.float32)],
            ),
            compiler_params=cparams,
            cost_estimate=pl.CostEstimate(
                flops=2 * n_rows * n_cols * d_out_pad,
                transcendentals=0,
                bytes_accessed=int(adj_p.size * adj_item
                                   + n_i * n_cols * d_out_pad * 4
                                   + b_p.size * 4 + n_rows * d_out_pad * 4)),
        )(nk_tbl, cnt, adj_p, support, b_p)

    # Slice padded rows / lanes back off.
    return out_p[:n, :d_out]


if __name__ == "__main__":
    # --- Main test: small N but multiple row/k tiles so the sparse tile-skip
    # and the accumulator pipeline are actually exercised.
    N, D_IN, D_OUT = 300, 16, 32

    key = jax.random.PRNGKey(0)
    k_inp, k_adj = jax.random.split(key)

    inp = jax.random.normal(k_inp, (N, D_IN), dtype=jnp.float32)
    # Dense-storage "sparse" adjacency: ~5% random 0/1 pattern with self-loops
    # (0/1 values are exact in bf16).
    adj_mat = (jax.random.uniform(k_adj, (N, N)) < 0.05).astype(jnp.float32)
    adj_mat = jnp.maximum(adj_mat, jnp.eye(N, dtype=jnp.float32))

    # Parameters initialized exactly like the module: torch.nn.init.ones_
    kernel = jnp.ones((D_IN, D_OUT), dtype=jnp.float32)
    bias = jnp.ones((D_OUT,), dtype=jnp.float32)

    out = jax.block_until_ready(graph_conv(inp, adj_mat, kernel, bias,
                                           tm=64, tk=128))
    ref = adj_mat @ (inp @ kernel) + bias
    assert out.shape == (N, D_OUT)
    assert jnp.allclose(out, ref, atol=1e-3, rtol=1e-3), float(
        jnp.max(jnp.abs(out - ref)))

    # --- D_in > D_out branch (separate support + adj kernels), default tiles.
    N2, D2_IN, D2_OUT = 64, 32, 16
    inp2 = jax.random.normal(jax.random.PRNGKey(3), (N2, D2_IN),
                             dtype=jnp.float32)
    adj2 = (jax.random.uniform(jax.random.PRNGKey(4), (N2, N2)) < 0.3
            ).astype(jnp.float32)
    adj2 = jnp.maximum(adj2, jnp.eye(N2, dtype=jnp.float32))
    kernel2 = jax.random.normal(jax.random.PRNGKey(1), (D2_IN, D2_OUT),
                                dtype=jnp.float32)
    bias2 = jax.random.normal(jax.random.PRNGKey(2), (D2_OUT,),
                              dtype=jnp.float32)
    out2 = jax.block_until_ready(graph_conv(inp2, adj2, kernel2, bias2))
    ref2 = adj2 @ (inp2 @ kernel2) + bias2
    assert jnp.allclose(out2, ref2, atol=1e-3, rtol=1e-3), float(
        jnp.max(jnp.abs(out2 - ref2)))

    print("KERNEL_OK")
</pallas_src>

<mosaic_0001>
module attributes {stable_mosaic.version = 11 : i64} {
  func.func @_fused_awi_kernel(%arg0: i32, %arg1: i32, %arg2: memref<5x3xi32, #tpu.memory_space<smem>>, %arg3: memref<5xi32, #tpu.memory_space<smem>>, %arg4: memref<64x128xbf16, #tpu.memory_space<vmem>>, %arg5: memref<128x128xf32, #tpu.memory_space<vmem>>, %arg6: memref<128x128xf32, #tpu.memory_space<vmem>>, %arg7: memref<1x128xf32, #tpu.memory_space<vmem>>, %arg8: memref<64x128xf32, #tpu.memory_space<vmem>>, %arg9: memref<64x128xf32, #tpu.memory_space<vmem>>) attributes {dimension_semantics = [#tpu.dimension_semantics<parallel>, #tpu.dimension_semantics<arbitrary>], iteration_bounds = array<i64: 5, 3>, scalar_prefetch = 2 : i64, scratch_operands = 1 : i64, tpu.core_type = #tpu.core_type<tc>, window_params = [{transform_indices = @transform_0, window_bounds = array<i64: 64, 128>}, {transform_indices = @transform_1, window_bounds = array<i64: 128, 128>}, {pipeline_mode = #tpu.pipeline_mode<synchronous>, transform_indices = @transform_2, window_bounds = array<i64: 128, 128>}, {pipeline_mode = #tpu.pipeline_mode<synchronous>, transform_indices = @transform_3, window_bounds = array<i64: 1, 128>}, {transform_indices = @transform_4, window_bounds = array<i64: 64, 128>}]} {
    %c0_i32 = arith.constant 0 : i32
    %0 = arith.cmpi eq, %arg1, %c0_i32 : i32
    %1 = arith.extui %0 : i1 to i32
    %c0_i32_0 = arith.constant 0 : i32
    %2 = arith.cmpi ne, %1, %c0_i32_0 : i32
    scf.if %2 {
      %cst = arith.constant 0.000000e+00 : f32
      %11 = vector.broadcast %cst : f32 to vector<64x128xf32>
      %c0 = arith.constant 0 : index
      %c0_3 = arith.constant 0 : index
      %12 = vector.load %arg9[%c0, %c0_3] : memref<64x128xf32, #tpu.memory_space<vmem>>, vector<64x128xf32>
      tpu.vector_store %arg9[%c0, %c0_3], %11 {strides = array<i32>} : memref<64x128xf32, #tpu.memory_space<vmem>>, vector<64x128xf32>,
    } else {
    }
    %3 = arith.index_cast %arg0 : i32 to index
    %4 = memref.load %arg3[%3] : memref<5xi32, #tpu.memory_space<smem>>
    %5 = arith.cmpi slt, %arg1, %4 : i32
    %6 = arith.extui %5 : i1 to i32
    %c0_i32_1 = arith.constant 0 : i32
    %7 = arith.cmpi ne, %6, %c0_i32_1 : i32
    scf.if %7 {
      %c0 = arith.constant 0 : index
      %c0_3 = arith.constant 0 : index
      %11 = vector.load %arg9[%c0, %c0_3] : memref<64x128xf32, #tpu.memory_space<vmem>>, vector<64x128xf32>
      %c0_4 = arith.constant 0 : index
      %c0_5 = arith.constant 0 : index
      %12 = vector.load %arg4[%c0_4, %c0_5] : memref<64x128xbf16, #tpu.memory_space<vmem>>, vector<64x128xbf16>
      %13 = arith.extf %12 : vector<64x128xbf16> to vector<64x128xf32>
      %c0_6 = arith.constant 0 : index
      %c0_7 = arith.constant 0 : index
      %14 = vector.load %arg5[%c0_6, %c0_7] : memref<128x128xf32, #tpu.memory_space<vmem>>, vector<128x128xf32>
      %cst = arith.constant dense<0.000000e+00> : vector<64x128xf32>
      %15 = tpu.matmul %13, %14, %cst {dimension_numbers = #tpu.dot_dimension_numbers<[1], [0], [0], [1], [0, 0, 1, 1], [], []>} : vector<64x128xf32>, vector<128x128xf32>, vector<64x128xf32> -> vector<64x128xf32>
      %16 = arith.addf %11, %15 : vector<64x128xf32>
      %c0_8 = arith.constant 0 : index
      %c0_9 = arith.constant 0 : index
      %17 = vector.load %arg9[%c0_8, %c0_9] : memref<64x128xf32, #tpu.memory_space<vmem>>, vector<64x128xf32>
      tpu.vector_store %arg9[%c0_8, %c0_9], %16 {strides = array<i32>} : memref<64x128xf32, #tpu.memory_space<vmem>>, vector<64x128xf32>,
    } else {
    }
    %c2_i32 = arith.constant 2 : i32
    %8 = arith.cmpi eq, %arg1, %c2_i32 : i32
    %9 = arith.extui %8 : i1 to i32
    %c0_i32_2 = arith.constant 0 : i32
    %10 = arith.cmpi ne, %9, %c0_i32_2 : i32
    scf.if %10 {
      %c0 = arith.constant 0 : index
      %c0_3 = arith.constant 0 : index
      %11 = vector.load %arg9[%c0, %c0_3] : memref<64x128xf32, #tpu.memory_space<vmem>>, vector<64x128xf32>
      %c0_4 = arith.constant 0 : index
      %c0_5 = arith.constant 0 : index
      %12 = vector.load %arg6[%c0_4, %c0_5] : memref<128x128xf32, #tpu.memory_space<vmem>>, vector<128x128xf32>
      %cst = arith.constant dense<0.000000e+00> : vector<64x128xf32>
      %13 = tpu.matmul %11, %12, %cst {dimension_numbers = #tpu.dot_dimension_numbers<[1], [0], [0], [1], [0, 0, 1, 1], [], []>} : vector<64x128xf32>, vector<128x128xf32>, vector<64x128xf32> -> vector<64x128xf32>
      %c0_6 = arith.constant 0 : index
      %c0_7 = arith.constant 0 : index
      %14 = vector.load %arg7[%c0_6, %c0_7] : memref<1x128xf32, #tpu.memory_space<vmem>>, vector<1x128xf32>
      %15 = vector.broadcast %14 : vector<1x128xf32> to vector<64x128xf32>
      %16 = arith.addf %13, %15 : vector<64x128xf32>
      %c0_8 = arith.constant 0 : index
      %c0_9 = arith.constant 0 : index
      %17 = vector.load %arg8[%c0_8, %c0_9] : memref<64x128xf32, #tpu.memory_space<vmem>>, vector<64x128xf32>
      tpu.vector_store %arg8[%c0_8, %c0_9], %16 {strides = array<i32>} : memref<64x128xf32, #tpu.memory_space<vmem>>, vector<64x128xf32>,
    } else {
    }
    return
  }
  func.func @transform_0(%arg0: i32, %arg1: i32, %arg2: memref<5x3xi32, #tpu.memory_space<smem>>, %arg3: memref<5xi32, #tpu.memory_space<smem>>) -> (i32, i32) {
    %0 = arith.index_cast %arg0 : i32 to index
    %1 = arith.index_cast %arg1 : i32 to index
    %2 = memref.load %arg2[%0, %1] : memref<5x3xi32, #tpu.memory_space<smem>>
    %c0_i32 = arith.constant 0 : i32
    return %arg0, %2 : i32, i32
  }
  func.func @transform_1(%arg0: i32, %arg1: i32, %arg2: memref<5x3xi32, #tpu.memory_space<smem>>, %arg3: memref<5xi32, #tpu.memory_space<smem>>) -> (i32, i32) {
    %0 = arith.index_cast %arg0 : i32 to index
    %1 = arith.index_cast %arg1 : i32 to index
    %2 = memref.load %arg2[%0, %1] : memref<5x3xi32, #tpu.memory_space<smem>>
    %c0_i32 = arith.constant 0 : i32
    %c0_i32_0 = arith.constant 0 : i32
    return %2, %c0_i32 : i32, i32
  }
  func.func @transform_2(%arg0: i32, %arg1: i32, %arg2: memref<5x3xi32, #tpu.memory_space<smem>>, %arg3: memref<5xi32, #tpu.memory_space<smem>>) -> (i32, i32) {
    %c0_i32 = arith.constant 0 : i32
    %c0_i32_0 = arith.constant 0 : i32
    %c0_i32_1 = arith.constant 0 : i32
    return %c0_i32, %c0_i32_0 : i32, i32
  }
  func.func @transform_3(%arg0: i32, %arg1: i32, %arg2: memref<5x3xi32, #tpu.memory_space<smem>>, %arg3: memref<5xi32, #tpu.memory_space<smem>>) -> (i32, i32) {
    %c0_i32 = arith.constant 0 : i32
    %c0_i32_0 = arith.constant 0 : i32
    %c0_i32_1 = arith.constant 0 : i32
    return %c0_i32, %c0_i32_0 : i32, i32
  }
  func.func @transform_4(%arg0: i32, %arg1: i32, %arg2: memref<5x3xi32, #tpu.memory_space<smem>>, %arg3: memref<5xi32, #tpu.memory_space<smem>>) -> (i32, i32) {
    %c0_i32 = arith.constant 0 : i32
    %c0_i32_0 = arith.constant 0 : i32
    return %arg0, %c0_i32 : i32, i32
  }
}

</mosaic_0001>

<llo_original>
// kernel: graph_conv.1
$region0: #{graph_conv.1}
  #allocation0 [shape = 'u32[]', space=smem, size = 0x4, offset = 0x4, fixed_abs, tag = 'smem constant byte address 0x4 - core index']
  #allocation1 [shape = 'u32[144,128]{1,0:T(1,128)}', space=vmem, size = 0x12000, scoped, tag = 'internal scratch']
  #allocation2 [shape = 'f32[64,128]{1,0:T(8,128)}', space=vmem, size = 0x8000, scoped, tag = 'scratch operand']
  #allocation3 [shape = 's32[1]{0}', space=sflag, size = 0x4, scoped, tag = 'scoped memory for graph_conv.1']
  #allocation4 [shape = 'u8[4096]{0}', space=smem, size = 0x1000, scoped, tag = 'prefetched SMEM operand 0']
  #allocation5 [shape = 'u8[512]{0}', space=smem, size = 0x200, scoped, tag = 'prefetched SMEM operand 1']
  %s0 = inlined_call_operand.vmem [shape: s32[5,3], index: 0, kind: input, shape index: {}]
  %s1 = inlined_call_operand.vmem [shape: s32[5], index: 1, kind: input, shape index: {}]
  %s2 = inlined_call_operand.vmem [shape: bf16[320,384], index: 2, kind: input, shape index: {}]
  %s3 = inlined_call_operand.vmem [shape: f32[384,128], index: 3, kind: input, shape index: {}]
  %s4 = inlined_call_operand.vmem [shape: f32[128,128], index: 4, kind: input, shape index: {}]
  %s5 = inlined_call_operand.vmem [shape: f32[1,128], index: 5, kind: input, shape index: {}]
  %s6 = inlined_call_operand.vmem [shape: f32[320,128], index: 6, kind: output, shape index: {}]
  %s7 = sld [smem:[#allocation0]]
  $region102: #{graph_conv.1} parent=0
    _
  %s9 = ssub.s32 1, %s7
  %s10 = scalar_select 0, %s9, %s7
  %s11 = sshll.u32 %s0, 4
  %s12 = int_to_ptr.vmem [resolvable:$true] %s11
  %14 = dma.vmem_to_smem %s12, 128, [#allocation4], [#allocation3]
  %s15 = sshll.u32 %s1, 4
  %s16 = int_to_ptr.vmem [resolvable:$true] %s15
  %18 = dma.vmem_to_smem %s16, 16, [#allocation5], [#allocation3]
  %19 = dma.done [#allocation3], 144
  %20 = sfence
  $region1: #{graph_conv.1} parent=0
    #allocation6 [shape = 'u8[32768]{0}', space=vmem, size = 0x8000, scoped, tag = 'input window, operand 2']
    loop: start=0, step=1, limit=17
    $region2: #{graph_conv.1} parent=1 // loop_pre_header
      _
    $region3: #{graph_conv.1} parent=1 // loop_header
      %s22 = sphi 0, %s26
      %p23 = scmp.ge.s32.totalorder %s22, 17
      %s29 = sphi 0, %s41
      %s30 = sphi 0, %s37
      %s31 = sphi 0, %s29
      %s32 = sphi 0, %s30
      %s33 = sphi 0, %s31
      %s34 = sphi 0, %s32
      %s62 = sphi 0, %s64
      %s65 = sphi 0, %s62
      %s66 = sphi 0, %s65
      %s82 = sphi 0, %s66
      %s104 = sphi 0, %s106
      %s107 = sphi 0, %s104
      %s108 = sphi 0, %s107
      %s124 = sphi 0, %s108
      %s128 = sphi 0, %s128
      %s130 = sphi 0, %s128
      %s131 = sphi 0, %s130
      %s145 = sphi 0, %s131
      %s149 = sphi 0, %s149
      %s151 = sphi 0, %s149
      %s152 = sphi 0, %s151
      %s166 = sphi 0, %s152
      %s172 = sphi 0, %s174
      %s175 = sphi 0, %s172
      %s176 = sphi 0, %s175
      %s192 = sphi 0, %s176
    $region4: #{graph_conv.1} parent=1 // loop_header_branch
      %25 = sbr.rel (%p23) target = $region8
    $region5: #{graph_conv.1} parent=1 // loop_body
      %s27 = ssub.s32 %s22, 1
      %s28 = ssub.s32 %s22, 2
      %s35 = sadd.s32 1, %s30
      %p36 = scmp.ge.s32.totalorder %s35, 3
      %s37 = scalar_select %p36, 0, %s35
      %s38 = sadd.s32 1, %s29
      %s39 = scalar_select %p36, %s38, %s29
      %p40 = scmp.ge.s32.totalorder %s39, 5
      %s41 = scalar_select %p40, 0, %s39
      %s42 = sshra.s32 %s30, 7
      %s43 = sand.u32 %s30, 127
      %s44 = sadd.s32 %s42, %s29
      %s45 = smul.u32 %s44, 128
      %s46 = sshra.s32 %s30, 7
      %s47 = sand.u32 %s30, 127
      %s48 = sadd.s32 %s45, %s47
      %s49 = sld [smem:[#allocation4 + %s48]]
      %s50 = sshra.s32 %s37, 7
      %s51 = sand.u32 %s37, 127
      %s52 = sadd.s32 %s50, %s41
      %s53 = smul.u32 %s52, 128
      %s54 = sshra.s32 %s37, 7
      %s55 = sand.u32 %s37, 127
      %s56 = sadd.s32 %s53, %s55
      %s57 = sld [smem:[#allocation4 + %s56]]
      %s58 = ssub.s32 %s29, %s41
      %s59 = ssub.s32 %s49, %s57
      %s60 = sor.u32 %s58, %s59
      %p61 = scmp.eq.s32.totalorder %s60, 0
      %s63 = sadd.s32 %s62, 1
      %s64 = scalar_select %p61, %s62, %s63
      %p67 = pneg %p61
      %p68 = scmp.eq.s32.totalorder %s22, 14
      %p69 = por %p67, %p68
      %p70 = scmp.ne.s32.totalorder %s62, %s65
      %p71 = scmp.eq.s32.totalorder %s22, 0
      %p72 = por %p70, %p71
      %p73 = scmp.ne.s32.totalorder %s62, %s65
      %p74 = scmp.eq.s32.totalorder %s27, 14
      %p75 = por %p73, %p74
      %p76 = scmp.ne.s32.totalorder %s65, %s66
      %p77 = scmp.eq.s32.totalorder %s27, 0
      %p78 = por %p76, %p77
      %p79 = scmp.ne.s32.totalorder %s65, %s66
      %p80 = scmp.eq.s32.totalorder %s28, 14
      %p81 = por %p79, %p80
      %p83 = scmp.ne.s32.totalorder %s66, %s82
      %p84 = scmp.eq.s32.totalorder %s28, 0
      %p85 = por %p83, %p84
      %s86 = sshra.s32 %s30, 7
      %s87 = sand.u32 %s30, 127
      %s88 = sadd.s32 %s86, %s29
      %s89 = smul.u32 %s88, 128
      %s90 = sshra.s32 %s30, 7
      %s91 = sand.u32 %s30, 127
      %s92 = sadd.s32 %s89, %s91
      %s93 = sld [smem:[#allocation4 + %s92]]
      %s94 = sshra.s32 %s37, 7
      %s95 = sand.u32 %s37, 127
      %s96 = sadd.s32 %s94, %s41
      %s97 = smul.u32 %s96, 128
      %s98 = sshra.s32 %s37, 7
      %s99 = sand.u32 %s37, 127
      %s100 = sadd.s32 %s97, %s99
      %s101 = sld [smem:[#allocation4 + %s100]]
      %s102 = ssub.s32 %s93, %s101
      %p103 = scmp.eq.s32.totalorder %s102, 0
      %s105 = sadd.s32 %s104, 1
      %s106 = scalar_select %p103, %s104, %s105
      %p109 = pneg %p103
      %p110 = scmp.eq.s32.totalorder %s22, 14
      %p111 = por %p109, %p110
      %p112 = scmp.ne.s32.totalorder %s104, %s107
      %p113 = scmp.eq.s32.totalorder %s22, 0
      %p114 = por %p112, %p113
      %p115 = scmp.ne.s32.totalorder %s104, %s107
      %p116 = scmp.eq.s32.totalorder %s27, 14
      %p117 = por %p115, %p116
      %p118 = scmp.ne.s32.totalorder %s107, %s108
      %p119 = scmp.eq.s32.totalorder %s27, 0
      %p120 = por %p118, %p119
      %p121 = scmp.ne.s32.totalorder %s107, %s108
      %p122 = scmp.eq.s32.totalorder %s28, 14
      %p123 = por %p121, %p122
      %p125 = scmp.ne.s32.totalorder %s108, %s124
      %p126 = scmp.eq.s32.totalorder %s28, 0
      %p127 = por %p125, %p126
      %s129 = sadd.s32 %s128, 1
      %p132 = scmp.eq.s32.totalorder %s22, 14
      %p133 = scmp.ne.s32.totalorder %s128, %s130
      %p134 = scmp.eq.s32.totalorder %s22, 0
      %p135 = por %p133, %p134
      %p136 = scmp.ne.s32.totalorder %s128, %s130
      %p137 = scmp.eq.s32.totalorder %s27, 14
      %p138 = por %p136, %p137
      %p139 = scmp.ne.s32.totalorder %s130, %s131
      %p140 = scmp.eq.s32.totalorder %s27, 0
      %p141 = por %p139, %p140
      %p142 = scmp.ne.s32.totalorder %s130, %s131
      %p143 = scmp.eq.s32.totalorder %s28, 14
      %p144 = por %p142, %p143
      %p146 = scmp.ne.s32.totalorder %s131, %s145
      %p147 = scmp.eq.s32.totalorder %s28, 0
      %p148 = por %p146, %p147
      %s150 = sadd.s32 %s149, 1
      %p153 = scmp.eq.s32.totalorder %s22, 14
      %p154 = scmp.ne.s32.totalorder %s149, %s151
      %p155 = scmp.eq.s32.totalorder %s22, 0
      %p156 = por %p154, %p155
      %p157 = scmp.ne.s32.totalorder %s149, %s151
      %p158 = scmp.eq.s32.totalorder %s27, 14
      %p159 = por %p157, %p158
      %p160 = scmp.ne.s32.totalorder %s151, %s152
      %p161 = scmp.eq.s32.totalorder %s27, 0
      %p162 = por %p160, %p161
      %p163 = scmp.ne.s32.totalorder %s151, %s152
      %p164 = scmp.eq.s32.totalorder %s28, 14
      %p165 = por %p163, %p164
      %p167 = scmp.ne.s32.totalorder %s152, %s166
      %p168 = scmp.eq.s32.totalorder %s28, 0
      %p169 = por %p167, %p168
      %s170 = ssub.s32 %s29, %s41
      %p171 = scmp.eq.s32.totalorder %s170, 0
      %s173 = sadd.s32 %s172, 1
      %s174 = scalar_select %p171, %s172, %s173
      %p177 = pneg %p171
      %p178 = scmp.eq.s32.totalorder %s22, 14
      %p179 = por %p177, %p178
      %p180 = scmp.ne.s32.totalorder %s172, %s175
      %p181 = scmp.eq.s32.totalorder %s22, 0
      %p182 = por %p180, %p181
      %p183 = scmp.ne.s32.totalorder %s172, %s175
      %p184 = scmp.eq.s32.totalorder %s27, 14
      %p185 = por %p183, %p184
      %p186 = scmp.ne.s32.totalorder %s175, %s176
      %p187 = scmp.eq.s32.totalorder %s27, 0
      %p188 = por %p186, %p187
      %p189 = scmp.ne.s32.totalorder %s175, %s176
      %p190 = scmp.eq.s32.totalorder %s28, 14
      %p191 = por %p189, %p190
      %p193 = scmp.ne.s32.totalorder %s176, %s192
      %p194 = scmp.eq.s32.totalorder %s28, 0
      %p195 = por %p193, %p194
      %p196 = scmp.le.s32.totalorder 1, %s22
      %p197 = scmp.lt.s32.totalorder %s22, 16
      %p198 = pnand %p196, %p197
      %p199 = pneg %p198
      // Predicated region
      $region9: #{graph_conv.1} parent=5 // pred_check
        _
      $region10: #{graph_conv.1} parent=5 // pred_check_branch
        %201 = sbr.rel (%p198) target = $region12
      $region11: #{graph_conv.1} parent=5 // pred_region
        %s202 = ssub.s32 %s22, 1
        // Predicated region
        $region13: #{graph_conv.1} parent=11 // pred_check
          %p203 = pneg %p141
        $region14: #{graph_conv.1} parent=11 // pred_check_branch
          %205 = sbr.rel (%p203) target = $region16
        $region15: #{graph_conv.1} parent=11 // pred_region
          _
        $region16: #{graph_conv.1} parent=11 // pred_fallthru
          _
        // Predicated region
        $region17: #{graph_conv.1} parent=11 // pred_check
          %p206 = pneg %p162
        $region18: #{graph_conv.1} parent=11 // pred_check_branch
          %208 = sbr.rel (%p206) target = $region20
        $region19: #{graph_conv.1} parent=11 // pred_region
          _
        $region20: #{graph_conv.1} parent=11 // pred_fallthru
          _
      $region12: #{graph_conv.1} parent=5 // pred_fallthru
        _
      %p209 = scmp.lt.s32.totalorder %s22, 15
      // Predicated region
      $region21: #{graph_conv.1} parent=5 // pred_check
        %p210 = pneg %p209
      $region22: #{graph_conv.1} parent=5 // pred_check_branch
        %212 = sbr.rel (%p210) target = $region24
      $region23: #{graph_conv.1} parent=5 // pred_region
        // Predicated region
        $region25: #{graph_conv.1} parent=23 // pred_check
          %p213 = pneg %p72
        $region26: #{graph_conv.1} parent=23 // pred_check_branch
          %215 = sbr.rel (%p213) target = $region28
        $region27: #{graph_conv.1} parent=23 // pred_region
          %s216 = sand.u32 %s62, 1
          %s217 = sand.u32 %s62, 1
          %s218 = smul.addr %s217, 32
          %s219 = scalar_lea.vmem [#allocation6], %s218
          %s220 = sshra.s32 %s30, 7
          %s221 = sand.u32 %s30, 127
          %s222 = sadd.s32 %s220, %s29
          %s223 = smul.u32 %s222, 128
          %s224 = sshra.s32 %s30, 7
          %s225 = sand.u32 %s30, 127
          %s226 = sadd.s32 %s223, %s225
          %s227 = sld [smem:[#allocation4 + %s226]]
          %s228 = smul.u32 8, %s29
          %s229 = smul.addr %s228, 3
          %s230 = sadd.s32 %s227, %s229
          %s231 = smul.addr %s230, 4
          %s232 = scalar_lea.vmem %s2, %s231
          // Predicated region
          $region29: #{graph_conv.1} parent=27 // pred_check
            _
          $region30: #{graph_conv.1} parent=27 // pred_check_branch
            %234 = sbr.rel (0) target = $region32
          $region31: #{graph_conv.1} parent=27 // pred_region
            // Predicated region
            $region33: #{graph_conv.1} parent=31 // pred_check
              _
            $region34: #{graph_conv.1} parent=31 // pred_check_branch
              %236 = sbr.rel target = $region36
            $region35: #{graph_conv.1} parent=31 // pred_region
              // Predicated region
              $region48: #{graph_conv.1} parent=35 // pred_check
                _
              $region49: #{graph_conv.1} parent=35 // pred_check_branch
                %265 = sbr.rel (0) target = $region51
              $region50: #{graph_conv.1} parent=35 // pred_region
                loop: start=0, step=1, limit=1
                $region52: #{graph_conv.1} parent=50 // loop_pre_header
                  _
                $region53: #{graph_conv.1} parent=50 // loop_header
                  %s267 = sphi 0, %s271
                  %p268 = scmp.ge.s32.totalorder %s267, 1
                  %s272 = sphi %s232, %s232
                  %s273 = sphi %s219, %s219
                $region54: #{graph_conv.1} parent=50 // loop_header_branch
                  %270 = sbr.rel (%p268) target = $region58
                $region55: #{graph_conv.1} parent=50 // loop_body
                  _
                $region56: #{graph_conv.1} parent=50 // loop_footer
                  %s271 = sadd.s32 1, %s267
                $region57: #{graph_conv.1} parent=50 // loop_footer_branch
                  %266 = sbr.rel target = $region53
                $region58: #{graph_conv.1} parent=50 // loop_exit
                  _
                loop: start=0, step=1, limit=1
                $region59: #{graph_conv.1} parent=50 // loop_pre_header
                  _
                $region60: #{graph_conv.1} parent=50 // loop_header
                  %s276 = sphi 0, %s280
                  %p277 = scmp.ge.s32.totalorder %s276, 1
                  %s281 = sphi %s232, %s232
                  %s282 = sphi %s219, %s219
                $region61: #{graph_conv.1} parent=50 // loop_header_branch
                  %279 = sbr.rel (%p277) target = $region65
                $region62: #{graph_conv.1} parent=50 // loop_body
                  %v283 = vld [vmem:[%s281] sm:$0xf]
                  %284 = vst [vmem:[%s282] sm:$0xf] %v283
                  %v285 = vld [vmem:[%s281 + $0xc] sm:$0xf]
                  %286 = vst [vmem:[%s282 + $0x4] sm:$0xf] %v285
                  %v287 = vld [vmem:[%s281 + $0x18] sm:$0xf]
                  %288 = vst [vmem:[%s282 + $0x8] sm:$0xf] %v287
                  %v289 = vld [vmem:[%s281 + $0x24] sm:$0xf]
                  %290 = vst [vmem:[%s282 + $0xc] sm:$0xf] %v289
                  %v291 = vld [vmem:[%s281 + $0x30] sm:$0xf]
                  %292 = vst [vmem:[%s282 + $0x10] sm:$0xf] %v291
                  %v293 = vld [vmem:[%s281 + $0x3c] sm:$0xf]
                  %294 = vst [vmem:[%s282 + $0x14] sm:$0xf] %v293
                  %v295 = vld [vmem:[%s281 + $0x48] sm:$0xf]
                  %296 = vst [vmem:[%s282 + $0x18] sm:$0xf] %v295
                  %v297 = vld [vmem:[%s281 + $0x54] sm:$0xf]
                  %298 = vst [vmem:[%s282 + $0x1c] sm:$0xf] %v297
                $region63: #{graph_conv.1} parent=50 // loop_footer
                  %s280 = sadd.s32 1, %s276
                $region64: #{graph_conv.1} parent=50 // loop_footer_branch
                  %275 = sbr.rel target = $region60
                $region65: #{graph_conv.1} parent=50 // loop_exit
                  _
              $region51: #{graph_conv.1} parent=35 // pred_fallthru
                _
            $region36: #{graph_conv.1} parent=31 // pred_fallthru
              _
            // Predicated region
            $region37: #{graph_conv.1} parent=31 // pred_check
              _
            $region38: #{graph_conv.1} parent=31 // pred_check_branch
              %238 = sbr.rel (0) target = $region40
            $region39: #{graph_conv.1} parent=31 // pred_region
              loop: start=0, step=1, limit=1
              $region41: #{graph_conv.1} parent=39 // loop_pre_header
                _
              $region42: #{graph_conv.1} parent=39 // loop_header
                %s241 = sphi 0, %s245
                %p242 = scmp.ge.s32.totalorder %s241, 1
                %s246 = sphi %s232, %s232
                %s247 = sphi %s219, %s219
              $region43: #{graph_conv.1} parent=39 // loop_header_branch
                %244 = sbr.rel (%p242) target = $region47
              $region44: #{graph_conv.1} parent=39 // loop_body
                %v248 = vld [vmem:[%s246] sm:$0xf]
                %249 = vst [vmem:[%s247] sm:$0xf] %v248
                %v250 = vld [vmem:[%s246 + $0xc] sm:$0xf]
                %251 = vst [vmem:[%s247 + $0x4] sm:$0xf] %v250
                %v252 = vld [vmem:[%s246 + $0x18] sm:$0xf]
                %253 = vst [vmem:[%s247 + $0x8] sm:$0xf] %v252
                %v254 = vld [vmem:[%s246 + $0x24] sm:$0xf]
                %255 = vst [vmem:[%s247 + $0xc] sm:$0xf] %v254
                %v256 = vld [vmem:[%s246 + $0x30] sm:$0xf]
                %257 = vst [vmem:[%s247 + $0x10] sm:$0xf] %v256
                %v258 = vld [vmem:[%s246 + $0x3c] sm:$0xf]
                %259 = vst [vmem:[%s247 + $0x14] sm:$0xf] %v258
                %v260 = vld [vmem:[%s246 + $0x48] sm:$0xf]
                %261 = vst [vmem:[%s247 + $0x18] sm:$0xf] %v260
                %v262 = vld [vmem:[%s246 + $0x54] sm:$0xf]
                %263 = vst [vmem:[%s247 + $0x1c] sm:$0xf] %v262
              $region45: #{graph_conv.1} parent=39 // loop_footer
                %s245 = sadd.s32 1, %s241
              $region46: #{graph_conv.1} parent=39 // loop_footer_branch
                %240 = sbr.rel target = $region42
              $region47: #{graph_conv.1} parent=39 // loop_exit
                _
            $region40: #{graph_conv.1} parent=31 // pred_fallthru
              _
          $region32: #{graph_conv.1} parent=27 // pred_fallthru
            _
          %299 = vnop
        $region28: #{graph_conv.1} parent=23 // pred_fallthru
          _
        // Predicated region
        $region66: #{graph_conv.1} parent=23 // pred_check
          %p300 = pneg %p114
        $region67: #{graph_conv.1} parent=23 // pred_check_branch
          %302 = sbr.rel (%p300) target = $region69
        $region68: #{graph_conv.1} parent=23 // pred_region
          %s303 = sshra.s32 %s30, 7
          %s304 = sand.u32 %s30, 127
          %s305 = sadd.s32 %s303, %s29
          %s306 = smul.u32 %s305, 128
          %s307 = sshra.s32 %s30, 7
          %s308 = sand.u32 %s30, 127
          %s309 = sadd.s32 %s306, %s308
          %s310 = sld [smem:[#allocation4 + %s309]]
          %s311 = smul.u32 16, %s310
          %p312 = scmp.lt.s32.totalorder %s311, 47
          %s313 = scalar_select %p312, %s311, 47
          %s314 = smul.addr %s313, 8
          %s315 = scalar_lea.vmem %s3, %s314
          %s316 = sshra.s32 %s30, 7
          %s317 = sand.u32 %s30, 127
          %s318 = sadd.s32 %s316, %s29
          %s319 = smul.u32 %s318, 128
          %s320 = sshra.s32 %s30, 7
          %s321 = sand.u32 %s30, 127
          %s322 = sadd.s32 %s319, %s321
          %s323 = sld [smem:[#allocation4 + %s322]]
          %s324 = smul.u32 16, %s323
        $region69: #{graph_conv.1} parent=23 // pred_fallthru
          _
      $region24: #{graph_conv.1} parent=5 // pred_fallthru
        _
      %p325 = scmp.le.s32.totalorder 1, %s22
      %p326 = scmp.lt.s32.totalorder %s22, 16
      %p327 = pnand %p325, %p326
      %p328 = pneg %p327
      // Predicated region
      $region70: #{graph_conv.1} parent=5 // pred_check
        _
      $region71: #{graph_conv.1} parent=5 // pred_check_branch
        %330 = sbr.rel (%p327) target = $region73
      $region72: #{graph_conv.1} parent=5 // pred_region
        %s331 = ssub.s32 %s22, 1
        %s332 = sand.u32 %s65, 1
        %s333 = sand.u32 %s65, 1
        %s334 = smul.addr %s333, 32
        %s335 = scalar_lea.vmem [#allocation6], %s334
        // Predicated region
        $region74: #{graph_conv.1} parent=72 // pred_check
          %p336 = pneg %p78
        $region75: #{graph_conv.1} parent=72 // pred_check_branch
          %338 = sbr.rel (%p336) target = $region77
        $region76: #{graph_conv.1} parent=72 // pred_region
          _
        $region77: #{graph_conv.1} parent=72 // pred_fallthru
          _
        %s339 = sand.u32 %s65, 1
        %s340 = sand.u32 %s65, 1
        %s341 = smul.addr %s340, 32
        %s342 = scalar_lea.vmem [#allocation6], %s341
        %p343 = pneg %p78
        %p344 = pneg %p75
        %s345 = sshra.s32 %s32, 7
        %s346 = sand.u32 %s32, 127
        %s347 = sadd.s32 %s345, %s31
        %s348 = smul.u32 %s347, 128
        %s349 = sshra.s32 %s32, 7
        %s350 = sand.u32 %s32, 127
        %s351 = sadd.s32 %s348, %s350
        %s352 = sld [smem:[#allocation4 + %s351]]
        %s353 = smul.u32 16, %s352
        %p354 = scmp.lt.s32.totalorder %s353, 47
        %s355 = scalar_select %p354, %s353, 47
        %s356 = smul.addr %s355, 8
        %s357 = scalar_lea.vmem %s3, %s356
        %p358 = pneg %p120
        %p359 = pneg %p117
        %p360 = pneg %p141
        %p361 = pneg %p138
        %p362 = pneg %p162
        %p363 = pneg %p159
        %p364 = pneg %p188
        %p365 = pneg %p185
        %s366 = smul.u32 8, %s31
        %p367 = scmp.lt.s32.totalorder %s366, 39
        %s368 = scalar_select %p367, %s366, 39
        %s369 = smul.addr %s368, 8
        %s370 = scalar_lea.vmem %s6, %s369
        %s371 = sshra.s32 %s32, 7
        %s372 = sand.u32 %s32, 127
        %s373 = sadd.s32 %s371, %s31
        %s374 = smul.u32 %s373, 128
        %s375 = sshra.s32 %s32, 7
        %s376 = sand.u32 %s32, 127
        %s377 = sadd.s32 %s374, %s376
        %s378 = sld [smem:[#allocation4 + %s377]]
        %s379 = smul.u32 8, %s31
        %s380 = sshra.s32 %s32, 7
        %s381 = sand.u32 %s32, 127
        %s382 = sadd.s32 %s380, %s31
        %s383 = smul.u32 %s382, 128
        %s384 = sshra.s32 %s32, 7
        %s385 = sand.u32 %s32, 127
        %s386 = sadd.s32 %s383, %s385
        %s387 = sld [smem:[#allocation4 + %s386]]
        %s388 = smul.u32 16, %s387
        %p389 = scmp.lt.s32.totalorder %s388, 47
        %s390 = scalar_select %p389, %s388, 47
        %s391 = smul.addr %s390, 8
        %s392 = scalar_lea.vmem %s3, %s391
        %s393 = sshra.s32 %s32, 7
        %s394 = sand.u32 %s32, 127
        %s395 = sadd.s32 %s393, %s31
        %s396 = smul.u32 %s395, 128
        %s397 = sshra.s32 %s32, 7
        %s398 = sand.u32 %s32, 127
        %s399 = sadd.s32 %s396, %s398
        %s400 = sld [smem:[#allocation4 + %s399]]
        %s401 = smul.u32 16, %s400
        %s402 = smul.u32 8, %s31
        %p403 = scmp.lt.s32.totalorder %s402, 39
        %s404 = scalar_select %p403, %s402, 39
        %s405 = smul.addr %s404, 8
        %s406 = scalar_lea.vmem %s6, %s405
        %s407 = smul.u32 8, %s31
        %p408 = scmp.eq.s32.totalorder %s32, 0
        // Predicated region
        $region78: #{graph_conv.1} parent=72 // pred_check
          %p409 = pneg %p408
        $region79: #{graph_conv.1} parent=72 // pred_check_branch
          %411 = sbr.rel (%p409) target = $region81
        $region80: #{graph_conv.1} parent=72 // pred_region
          %412 = vst [vmem:[#allocation2] sm:$0xff] 0.0
          %413 = vst [vmem:[#allocation2 + $0x8] sm:$0xff] 0.0
          %414 = vst [vmem:[#allocation2 + $0x10] sm:$0xff] 0.0
          %415 = vst [vmem:[#allocation2 + $0x18] sm:$0xff] 0.0
          %416 = vst [vmem:[#allocation2 + $0x20] sm:$0xff] 0.0
          %417 = vst [vmem:[#allocation2 + $0x28] sm:$0xff] 0.0
          %418 = vst [vmem:[#allocation2 + $0x30] sm:$0xff] 0.0
          %419 = vst [vmem:[#allocation2 + $0x38] sm:$0xff] 0.0
        $region81: #{graph_conv.1} parent=72 // pred_fallthru
          _
        %s420 = sld [smem:[#allocation5 + %s31]]
        %p421 = scmp.lt.s32.totalorder %s32, %s420
        // Predicated region
        $region82: #{graph_conv.1} parent=72 // pred_check
          %p422 = pneg %p421
        $region83: #{graph_conv.1} parent=72 // pred_check_branch
          %424 = sbr.rel (%p422) target = $region85
        $region84: #{graph_conv.1} parent=72 // pred_region
          %v425 = vld [vmem:[#allocation2] sm:$0xff]
          %v426 = vld [vmem:[#allocation2 + $0x8] sm:$0xff]
          %v427 = vld [vmem:[#allocation2 + $0x10] sm:$0xff]
          %v428 = vld [vmem:[#allocation2 + $0x18] sm:$0xff]
          %v429 = vld [vmem:[#allocation2 + $0x20] sm:$0xff]
          %v430 = vld [vmem:[#allocation2 + $0x28] sm:$0xff]
          %v431 = vld [vmem:[#allocation2 + $0x30] sm:$0xff]
          %v432 = vld [vmem:[#allocation2 + $0x38] sm:$0xff]
          %v433 = vld [vmem:[%s335] sm:$0xf]
          %v434 = vld [vmem:[%s335 + $0x4] sm:$0xf]
          %v435 = vld [vmem:[%s335 + $0x8] sm:$0xf]
          %v436 = vld [vmem:[%s335 + $0xc] sm:$0xf]
          %v437 = vld [vmem:[%s335 + $0x10] sm:$0xf]
          %v438 = vld [vmem:[%s335 + $0x14] sm:$0xf]
          %v439 = vld [vmem:[%s335 + $0x18] sm:$0xf]
          %v440 = vld [vmem:[%s335 + $0x1c] sm:$0xf]
          %v441 = vunpack.c.l.bf16 %v433
          %v442 = vunpack.c.l.bf16 %v434
          %v443 = vunpack.c.l.bf16 %v435
          %v444 = vunpack.c.l.bf16 %v436
          %v445 = vunpack.c.l.bf16 %v437
          %v446 = vunpack.c.l.bf16 %v438
          %v447 = vunpack.c.l.bf16 %v439
          %v448 = vunpack.c.l.bf16 %v440
          %v449 = vld [vmem:[%s392] sm:$0xff]
          %v450 = vld [vmem:[%s392 + $0x8] sm:$0xff]
          %v451 = vld [vmem:[%s392 + $0x10] sm:$0xff]
          %v452 = vld [vmem:[%s392 + $0x18] sm:$0xff]
          %v453 = vld [vmem:[%s392 + $0x20] sm:$0xff]
          %v454 = vld [vmem:[%s392 + $0x28] sm:$0xff]
          %v455 = vld [vmem:[%s392 + $0x30] sm:$0xff]
          %v456 = vld [vmem:[%s392 + $0x38] sm:$0xff]
          %v457 = vld [vmem:[%s392 + $0x40] sm:$0xff]
          %v458 = vld [vmem:[%s392 + $0x48] sm:$0xff]
          %v459 = vld [vmem:[%s392 + $0x50] sm:$0xff]
          %v460 = vld [vmem:[%s392 + $0x58] sm:$0xff]
          %v461 = vld [vmem:[%s392 + $0x60] sm:$0xff]
          %v462 = vld [vmem:[%s392 + $0x68] sm:$0xff]
          %v463 = vld [vmem:[%s392 + $0x70] sm:$0xff]
          %v464 = vld [vmem:[%s392 + $0x78] sm:$0xff]
          %465 = vmatprep.subr.mxu0 0.0
          %466 = vmatpush1.msra.mxu0 %v449
          %467 = vmatprep.subr.mxu0 0.0
          %468 = vmatpush1.msra.mxu0 %v450
          %469 = vmatprep.subr.mxu0 0.0
          %470 = vmatpush1.msra.mxu0 %v451
          %471 = vmatprep.subr.mxu0 0.0
          %472 = vmatpush1.msra.mxu0 %v452
          %473 = vmatprep.subr.mxu0 0.0
          %474 = vmatpush1.msra.mxu0 %v453
          %475 = vmatprep.subr.mxu0 0.0
          %476 = vmatpush1.msra.mxu0 %v454
          %477 = vmatprep.subr.mxu0 0.0
          %478 = vmatpush1.msra.mxu0 %v455
          %479 = vmatprep.subr.mxu0 0.0
          %480 = vmatpush1.msra.mxu0 %v456
          %481 = vmatprep.subr.mxu0 0.0
          %482 = vmatpush1.msra.mxu0 %v457
          %483 = vmatprep.subr.mxu0 0.0
          %484 = vmatpush1.msra.mxu0 %v458
          %485 = vmatprep.subr.mxu0 0.0
          %486 = vmatpush1.msra.mxu0 %v459
          %487 = vmatprep.subr.mxu0 0.0
          %488 = vmatpush1.msra.mxu0 %v460
          %489 = vmatprep.subr.mxu0 0.0
          %490 = vmatpush1.msra.mxu0 %v461
          %491 = vmatprep.subr.mxu0 0.0
          %492 = vmatpush1.msra.mxu0 %v462
          %493 = vmatprep.subr.mxu0 0.0
          %494 = vmatpush1.msra.mxu0 %v463
          %495 = vmatprep.subr.mxu0 0.0
          %496 = vmatpush1.msra.mxu0 %v464
          %497 = vmatprep.subr.mxu0 0.0
          %498 = vmatpush1.msra.mxu0 0.0
          %499 = vmatprep.subr.mxu0 0.0
          %500 = vmatpush1.msra.mxu0 0.0
          %501 = vmatprep.subr.mxu0 0.0
          %502 = vmatpush1.msra.mxu0 0.0
          %503 = vmatprep.subr.mxu0 0.0
          %504 = vmatpush1.msra.mxu0 0.0
          %505 = vmatprep.subr.mxu0 0.0
          %506 = vmatpush1.msra.mxu0 0.0
          %507 = vmatprep.subr.mxu0 0.0
          %508 = vmatpush1.msra.mxu0 0.0
          %509 = vmatprep.subr.mxu0 0.0
          %510 = vmatpush1.msra.mxu0 0.0
          %511 = vmatprep.subr.mxu0 0.0
          %512 = vmatpush1.msra.mxu0 0.0
          %513 = vmatprep.subr.mxu0 0.0
          %514 = vmatpush1.msra.mxu0 0.0
          %515 = vmatprep.subr.mxu0 0.0
          %516 = vmatpush1.msra.mxu0 0.0
          %517 = vmatprep.subr.mxu0 0.0
          %518 = vmatpush1.msra.mxu0 0.0
          %519 = vmatprep.subr.mxu0 0.0
          %520 = vmatpush1.msra.mxu0 0.0
          %521 = vmatprep.subr.mxu0 0.0
          %522 = vmatpush1.msra.mxu0 0.0
          %523 = vmatprep.subr.mxu0 0.0
          %524 = vmatpush1.msra.mxu0 0.0
          %525 = vmatprep.subr.mxu0 0.0
          %526 = vmatpush1.msra.mxu0 0.0
          %527 = vmatprep.subr.mxu0 0.0
          %528 = vmatpush1.msra.mxu0 0.0
          %529 = vmatprep.mubr.f32.mxu0 0.0
          %530 = vmatmul.mubr.f32.gmra.mrb[0].mxu0 %v441
          %v531 = vpop.f32.mrb[0].mxu0
          %v532 = vadd.f32 0.0, %v531
          %v533 = vpop.f32.mrb[0].mxu0
          %534 = vmatprep.mubr.f32.mxu0 0.0
          %535 = vmatmul.mubr.f32.gmra.mrb[0].mxu0 %v442
          %v536 = vpop.f32.mrb[0].mxu0
          %v537 = vadd.f32 0.0, %v536
          %v538 = vpop.f32.mrb[0].mxu0
          %539 = vmatprep.mubr.f32.mxu0 0.0
          %540 = vmatmul.mubr.f32.gmra.mrb[0].mxu0 %v443
          %v541 = vpop.f32.mrb[0].mxu0
          %v542 = vadd.f32 0.0, %v541
          %v543 = vpop.f32.mrb[0].mxu0
          %544 = vmatprep.mubr.f32.mxu0 0.0
          %545 = vmatmul.mubr.f32.gmra.mrb[0].mxu0 %v444
          %v546 = vpop.f32.mrb[0].mxu0
          %v547 = vadd.f32 0.0, %v546
          %v548 = vpop.f32.mrb[0].mxu0
          %549 = vmatprep.mubr.f32.mxu0 0.0
          %550 = vmatmul.mubr.f32.gmra.mrb[0].mxu0 %v445
          %v551 = vpop.f32.mrb[0].mxu0
          %v552 = vadd.f32 0.0, %v551
          %v553 = vpop.f32.mrb[0].mxu0
          %554 = vmatprep.mubr.f32.mxu0 0.0
          %555 = vmatmul.mubr.f32.gmra.mrb[0].mxu0 %v446
          %v556 = vpop.f32.mrb[0].mxu0
          %v557 = vadd.f32 0.0, %v556
          %v558 = vpop.f32.mrb[0].mxu0
          %559 = vmatprep.mubr.f32.mxu0 0.0
          %560 = vmatmul.mubr.f32.gmra.mrb[0].mxu0 %v447
          %v561 = vpop.f32.mrb[0].mxu0
          %v562 = vadd.f32 0.0, %v561
          %v563 = vpop.f32.mrb[0].mxu0
          %564 = vmatprep.mubr.f32.mxu0 0.0
          %565 = vmatmul.mubr.f32.gmra.mrb[0].mxu0 %v448
          %v566 = vpop.f32.mrb[0].mxu0
          %v567 = vadd.f32 0.0, %v566
          %v568 = vpop.f32.mrb[0].mxu0
          %569 = vdwg.mxu0
          %v570 = vadd.f32 %v425, %v532
          %v571 = vadd.f32 %v426, %v537
          %v572 = vadd.f32 %v427, %v542
          %v573 = vadd.f32 %v428, %v547
          %v574 = vadd.f32 %v429, %v552
          %v575 = vadd.f32 %v430, %v557
          %v576 = vadd.f32 %v431, %v562
          %v577 = vadd.f32 %v432, %v567
          %578 = vst [vmem:[#allocation2] sm:$0xff] %v570
          %579 = vst [vmem:[#allocation2 + $0x8] sm:$0xff] %v571
          %580 = vst [vmem:[#allocation2 + $0x10] sm:$0xff] %v572
          %581 = vst [vmem:[#allocation2 + $0x18] sm:$0xff] %v573
          %582 = vst [vmem:[#allocation2 + $0x20] sm:$0xff] %v574
          %583 = vst [vmem:[#allocation2 + $0x28] sm:$0xff] %v575
          %584 = vst [vmem:[#allocation2 + $0x30] sm:$0xff] %v576
          %585 = vst [vmem:[#allocation2 + $0x38] sm:$0xff] %v577
        $region85: #{graph_conv.1} parent=72 // pred_fallthru
          _
        %p586 = scmp.eq.s32.totalorder %s32, 2
        // Predicated region
        $region86: #{graph_conv.1} parent=72 // pred_check
          %p587 = pneg %p586
        $region87: #{graph_conv.1} parent=72 // pred_check_branch
          %589 = sbr.rel (%p587) target = $region89
        $region88: #{graph_conv.1} parent=72 // pred_region
          %v590 = vld [vmem:[#allocation2] sm:$0xff]
          %v591 = vld [vmem:[#allocation2 + $0x8] sm:$0xff]
          %v592 = vld [vmem:[#allocation2 + $0x10] sm:$0xff]
          %v593 = vld [vmem:[#allocation2 + $0x18] sm:$0xff]
          %v594 = vld [vmem:[#allocation2 + $0x20] sm:$0xff]
          %v595 = vld [vmem:[#allocation2 + $0x28] sm:$0xff]
          %v596 = vld [vmem:[#allocation2 + $0x30] sm:$0xff]
          %v597 = vld [vmem:[#allocation2 + $0x38] sm:$0xff]
          %v598 = vld [vmem:[%s4] sm:$0xff]
          %v599 = vld [vmem:[%s4 + $0x8] sm:$0xff]
          %v600 = vld [vmem:[%s4 + $0x10] sm:$0xff]
          %v601 = vld [vmem:[%s4 + $0x18] sm:$0xff]
          %v602 = vld [vmem:[%s4 + $0x20] sm:$0xff]
          %v603 = vld [vmem:[%s4 + $0x28] sm:$0xff]
          %v604 = vld [vmem:[%s4 + $0x30] sm:$0xff]
          %v605 = vld [vmem:[%s4 + $0x38] sm:$0xff]
          %v606 = vld [vmem:[%s4 + $0x40] sm:$0xff]
          %v607 = vld [vmem:[%s4 + $0x48] sm:$0xff]
          %v608 = vld [vmem:[%s4 + $0x50] sm:$0xff]
          %v609 = vld [vmem:[%s4 + $0x58] sm:$0xff]
          %v610 = vld [vmem:[%s4 + $0x60] sm:$0xff]
          %v611 = vld [vmem:[%s4 + $0x68] sm:$0xff]
          %v612 = vld [vmem:[%s4 + $0x70] sm:$0xff]
          %v613 = vld [vmem:[%s4 + $0x78] sm:$0xff]
          %v614 = vld [vmem:[%s5] sm:$0x1]
          %v616 = vlaneseq
          %v617 = vshrl.u32 %v616, 7
          %v618 = vsub.s32 0, %v617
          %v619 = vrot.slane %v614, %v618
          %621 = vmatprep.subr.mxu0 0.0
          %622 = vmatpush1.msra.mxu0 %v598
          %623 = vmatprep.subr.mxu0 0.0
          %624 = vmatpush1.msra.mxu0 %v599
          %625 = vmatprep.subr.mxu0 0.0
          %626 = vmatpush1.msra.mxu0 %v600
          %627 = vmatprep.subr.mxu0 0.0
          %628 = vmatpush1.msra.mxu0 %v601
          %629 = vmatprep.subr.mxu0 0.0
          %630 = vmatpush1.msra.mxu0 %v602
          %631 = vmatprep.subr.mxu0 0.0
          %632 = vmatpush1.msra.mxu0 %v603
          %633 = vmatprep.subr.mxu0 0.0
          %634 = vmatpush1.msra.mxu0 %v604
          %635 = vmatprep.subr.mxu0 0.0
          %636 = vmatpush1.msra.mxu0 %v605
          %637 = vmatprep.subr.mxu0 0.0
          %638 = vmatpush1.msra.mxu0 %v606
          %639 = vmatprep.subr.mxu0 0.0
          %640 = vmatpush1.msra.mxu0 %v607
          %641 = vmatprep.subr.mxu0 0.0
          %642 = vmatpush1.msra.mxu0 %v608
          %643 = vmatprep.subr.mxu0 0.0
          %644 = vmatpush1.msra.mxu0 %v609
          %645 = vmatprep.subr.mxu0 0.0
          %646 = vmatpush1.msra.mxu0 %v610
          %647 = vmatprep.subr.mxu0 0.0
          %648 = vmatpush1.msra.mxu0 %v611
          %649 = vmatprep.subr.mxu0 0.0
          %650 = vmatpush1.msra.mxu0 %v612
          %651 = vmatprep.subr.mxu0 0.0
          %652 = vmatpush1.msra.mxu0 %v613
          %653 = vmatprep.subr.mxu0 0.0
          %654 = vmatpush1.msra.mxu0 0.0
          %655 = vmatprep.subr.mxu0 0.0
          %656 = vmatpush1.msra.mxu0 0.0
          %657 = vmatprep.subr.mxu0 0.0
          %658 = vmatpush1.msra.mxu0 0.0
          %659 = vmatprep.subr.mxu0 0.0
          %660 = vmatpush1.msra.mxu0 0.0
          %661 = vmatprep.subr.mxu0 0.0
          %662 = vmatpush1.msra.mxu0 0.0
          %663 = vmatprep.subr.mxu0 0.0
          %664 = vmatpush1.msra.mxu0 0.0
          %665 = vmatprep.subr.mxu0 0.0
          %666 = vmatpush1.msra.mxu0 0.0
          %667 = vmatprep.subr.mxu0 0.0
          %668 = vmatpush1.msra.mxu0 0.0
          %669 = vmatprep.subr.mxu0 0.0
          %670 = vmatpush1.msra.mxu0 0.0
          %671 = vmatprep.subr.mxu0 0.0
          %672 = vmatpush1.msra.mxu0 0.0
          %673 = vmatprep.subr.mxu0 0.0
          %674 = vmatpush1.msra.mxu0 0.0
          %675 = vmatprep.subr.mxu0 0.0
          %676 = vmatpush1.msra.mxu0 0.0
          %677 = vmatprep.subr.mxu0 0.0
          %678 = vmatpush1.msra.mxu0 0.0
          %679 = vmatprep.subr.mxu0 0.0
          %680 = vmatpush1.msra.mxu0 0.0
          %681 = vmatprep.subr.mxu0 0.0
          %682 = vmatpush1.msra.mxu0 0.0
          %683 = vmatprep.subr.mxu0 0.0
          %684 = vmatpush1.msra.mxu0 0.0
          %685 = vmatprep.mubr.f32.mxu0 0.0
          %686 = vmatmul.mubr.f32.gmra.mrb[0].mxu0 %v590
          %v687 = vpop.f32.mrb[0].mxu0
          %v688 = vadd.f32 %v619, %v687
          %v689 = vpop.f32.mrb[0].mxu0
          %690 = vmatprep.mubr.f32.mxu0 0.0
          %691 = vmatmul.mubr.f32.gmra.mrb[0].mxu0 %v591
          %v692 = vpop.f32.mrb[0].mxu0
          %v693 = vadd.f32 %v619, %v692
          %v694 = vpop.f32.mrb[0].mxu0
          %695 = vmatprep.mubr.f32.mxu0 0.0
          %696 = vmatmul.mubr.f32.gmra.mrb[0].mxu0 %v592
          %v697 = vpop.f32.mrb[0].mxu0
          %v698 = vadd.f32 %v619, %v697
          %v699 = vpop.f32.mrb[0].mxu0
          %700 = vmatprep.mubr.f32.mxu0 0.0
          %701 = vmatmul.mubr.f32.gmra.mrb[0].mxu0 %v593
          %v702 = vpop.f32.mrb[0].mxu0
          %v703 = vadd.f32 %v619, %v702
          %v704 = vpop.f32.mrb[0].mxu0
          %705 = vmatprep.mubr.f32.mxu0 0.0
          %706 = vmatmul.mubr.f32.gmra.mrb[0].mxu0 %v594
          %v707 = vpop.f32.mrb[0].mxu0
          %v708 = vadd.f32 %v619, %v707
          %v709 = vpop.f32.mrb[0].mxu0
          %710 = vmatprep.mubr.f32.mxu0 0.0
          %711 = vmatmul.mubr.f32.gmra.mrb[0].mxu0 %v595
          %v712 = vpop.f32.mrb[0].mxu0
          %v713 = vadd.f32 %v619, %v712
          %v714 = vpop.f32.mrb[0].mxu0
          %715 = vmatprep.mubr.f32.mxu0 0.0
          %716 = vmatmul.mubr.f32.gmra.mrb[0].mxu0 %v596
          %v717 = vpop.f32.mrb[0].mxu0
          %v718 = vadd.f32 %v619, %v717
          %v719 = vpop.f32.mrb[0].mxu0
          %720 = vmatprep.mubr.f32.mxu0 0.0
          %721 = vmatmul.mubr.f32.gmra.mrb[0].mxu0 %v597
          %v722 = vpop.f32.mrb[0].mxu0
          %v723 = vadd.f32 %v619, %v722
          %v724 = vpop.f32.mrb[0].mxu0
          %725 = vdwg.mxu0
          %726 = vst [vmem:[%s406] sm:$0xff] %v688
          %727 = vst [vmem:[%s406 + $0x8] sm:$0xff] %v693
          %728 = vst [vmem:[%s406 + $0x10] sm:$0xff] %v698
          %729 = vst [vmem:[%s406 + $0x18] sm:$0xff] %v703
          %730 = vst [vmem:[%s406 + $0x20] sm:$0xff] %v708
          %731 = vst [vmem:[%s406 + $0x28] sm:$0xff] %v713
          %732 = vst [vmem:[%s406 + $0x30] sm:$0xff] %v718
          %733 = vst [vmem:[%s406 + $0x38] sm:$0xff] %v723
        $region89: #{graph_conv.1} parent=72 // pred_fallthru
          _
        %s734 = smul.u32 8, %s31
        %p735 = scmp.lt.s32.totalorder %s734, 39
        %s736 = scalar_select %p735, %s734, 39
        %s737 = smul.addr %s736, 8
        %s738 = scalar_lea.vmem %s6, %s737
        // Predicated region
        $region90: #{graph_conv.1} parent=72 // pred_check
          %p739 = pneg %p185
        $region91: #{graph_conv.1} parent=72 // pred_check_branch
          %741 = sbr.rel (%p739) target = $region93
        $region92: #{graph_conv.1} parent=72 // pred_region
          %s742 = smul.u32 8, %s31
        $region93: #{graph_conv.1} parent=72 // pred_fallthru
          _
      $region73: #{graph_conv.1} parent=5 // pred_fallthru
        _
      %p743 = scmp.le.s32.totalorder 2, %s22
      // Predicated region
      $region94: #{graph_conv.1} parent=5 // pred_check
        %p744 = pneg %p743
      $region95: #{graph_conv.1} parent=5 // pred_check_branch
        %746 = sbr.rel (%p744) target = $region97
      $region96: #{graph_conv.1} parent=5 // pred_region
        %s747 = ssub.s32 %s22, 2
        // Predicated region
        $region98: #{graph_conv.1} parent=96 // pred_check
          %p748 = pneg %p191
        $region99: #{graph_conv.1} parent=96 // pred_check_branch
          %750 = sbr.rel (%p748) target = $region101
        $region100: #{graph_conv.1} parent=96 // pred_region
          %s751 = smul.u32 8, %s33
          %p752 = scmp.lt.s32.totalorder %s751, 39
          %s753 = scalar_select %p752, %s751, 39
          %s754 = smul.addr %s753, 8
          %s755 = scalar_lea.vmem %s6, %s754
        $region101: #{graph_conv.1} parent=96 // pred_fallthru
          _
      $region97: #{graph_conv.1} parent=5 // pred_fallthru
        _
    $region6: #{graph_conv.1} parent=1 // loop_footer
      %s26 = sadd.s32 1, %s22
    $region7: #{graph_conv.1} parent=1 // loop_footer_branch
      %21 = sbr.rel target = $region3
    $region8: #{graph_conv.1} parent=1 // loop_exit
      _

</llo_original>
